<compile_context>
chip_gen: v7x
topology: tpu7x:2x2x1
jax: 0.10.0
libtpu: 0.0.40
codegen_flags: <defaults>
</compile_context>

<pallas_src>
import jax
import jax.numpy as jnp
from jax.experimental import pallas as pl
from jax.experimental.pallas import tpu as pltpu


def _round_up(n, m):
    return ((n + m - 1) // m) * m


def _leaky_relu(x, slope=0.2):
    return jnp.where(x > 0, x, slope * x)


def _pick_tile(B, *, max_tb=1024, target_steps=4):
    """Batch tile: single tile for tiny B, otherwise >= `target_steps` grid
    steps (v7x megacore) with the tile capped at `max_tb` (v5e VMEM)."""
    if B <= 256:
        return _round_up(B, 32)
    n_steps = max(target_steps, pl.cdiv(B, max_tb))
    tb = _round_up(pl.cdiv(B, n_steps), 32)
    return min(max(tb, 32), max_tb)


def discriminator_kernel(x_ref, w1_ref, b1_ref, w2_ref, b2_ref, w3_ref, b3_ref,
                         o_ref):
    # Layer 1: cast the streamed f32 tile to bf16 on the fly, MXU matmul with
    # f32 accumulation.  (tb, 784) @ (784, 256) -> (tb, 256) f32.
    x_bf = x_ref[...].astype(jnp.bfloat16)
    h1 = jnp.dot(x_bf, w1_ref[...], preferred_element_type=jnp.float32)
    h1 = _leaky_relu(h1 + b1_ref[...])                          # f32 (tb, 256)

    # Layer 2: bf16 matmul, f32 accumulate, f32 epilogue.
    h2 = jnp.dot(h1.astype(jnp.bfloat16), w2_ref[...],
                 preferred_element_type=jnp.float32)
    h2 = _leaky_relu(h2 + b2_ref[...])                          # f32 (tb, 256)

    # Layer 3 (256 -> 1): VPU multiply against the f32 weight row + XLU
    # cross-lane reduce; scalar bias from SMEM.
    logits = jnp.sum(h2 * w3_ref[...], axis=-1, keepdims=True) + b3_ref[0, 0]
    o_ref[...] = jax.nn.sigmoid(logits).astype(o_ref.dtype)     # (tb, 1)


def discriminator_forward(x, params):
    """x: (B, 784) float32.  params: (in,out)-layout weights / biases (f32)."""
    B, D = x.shape
    assert D == 784

    tb = _pick_tile(B)
    B_pad = _round_up(B, tb)
    if B_pad != B:
        # Only the small remainder rows are padded (zeros -> harmless, rows
        # are sliced off below); no full pad/cast pass over x.
        x = jnp.pad(x, ((0, B_pad - B), (0, 0)))

    w1 = params["w1"].astype(jnp.bfloat16)            # (784, 256) bf16
    w2 = params["w2"].astype(jnp.bfloat16)            # (256, 256) bf16
    w3 = params["w3"].reshape(1, 256)                 # (1, 256)  f32 (VPU path)
    b1 = params["b1"]                                 # (1, 256)  f32
    b2 = params["b2"]                                 # (1, 256)  f32
    b3 = params["b3"].reshape(1, 1)                   # (1, 1)    f32 -> SMEM

    full = lambda shape: pl.BlockSpec(shape, lambda i: (0, 0))

    out = pl.pallas_call(
        discriminator_kernel,
        out_shape=jax.ShapeDtypeStruct((B_pad, 1), jnp.float32),
        grid_spec=pltpu.PrefetchScalarGridSpec(
            num_scalar_prefetch=0,
            grid=(B_pad // tb,),
            in_specs=[
                pl.BlockSpec((tb, D), lambda i: (i, 0)),            # x tile (f32)
                full(w1.shape), full(b1.shape),
                full(w2.shape), full(b2.shape),
                full(w3.shape),
                pl.BlockSpec(memory_space=pltpu.MemorySpace.SMEM),  # b3 scalar
            ],
            out_specs=pl.BlockSpec((tb, 1), lambda i: (i, 0)),
        ),
        compiler_params=pltpu.CompilerParams(
            dimension_semantics=("parallel",)),
    )(x, w1, b1, w2, b2, w3, b3)

    return out[:B]


def init_params(key):
    """Deterministic init matching nn.Linear shapes (stored (in, out))."""
    k1, k2, k3, k4, k5, k6 = jax.random.split(key, 6)

    def lin(kw, kb, fan_in, fan_out):
        # PyTorch nn.Linear default: U(-1/sqrt(fan_in), 1/sqrt(fan_in))
        bound = 1.0 / (fan_in ** 0.5)
        w = jax.random.uniform(kw, (fan_in, fan_out), jnp.float32,
                               minval=-bound, maxval=bound)
        b = jax.random.uniform(kb, (1, fan_out), jnp.float32,
                               minval=-bound, maxval=bound)
        return w, b

    w1, b1 = lin(k1, k2, 784, 256)
    w2, b2 = lin(k3, k4, 256, 256)
    w3, b3 = lin(k5, k6, 256, 1)
    return dict(w1=w1, b1=b1, w2=w2, b2=b2, w3=w3, b3=b3)


def reference_forward(x, p):
    h1 = x @ p["w1"] + p["b1"]
    h1 = jnp.where(h1 > 0, h1, 0.2 * h1)
    h2 = h1 @ p["w2"] + p["b2"]
    h2 = jnp.where(h2 > 0, h2, 0.2 * h2)
    return jax.nn.sigmoid(h2 @ p["w3"] + p["b3"])


if __name__ == "__main__":
    key = jax.random.PRNGKey(0)
    kx, kp = jax.random.split(key)
    params = init_params(kp)

    # Small-batch check (module-shaped input: (B, 784)), single grid step.
    B = 8
    x = jax.random.normal(kx, (B, 784), jnp.float32)
    out = jax.block_until_ready(discriminator_forward(x, params))
    ref = reference_forward(x, params)
    assert out.shape == (B, 1)
    err = float(jnp.max(jnp.abs(out - ref)))
    assert err < 2.5e-2, f"mismatch (small batch): max abs err {err}"

    # Larger, ragged batch exercises the multi-step "parallel" grid path and
    # the remainder-row padding.
    B2 = 1000
    x2 = jax.random.normal(jax.random.PRNGKey(1), (B2, 784), jnp.float32)
    out2 = jax.block_until_ready(discriminator_forward(x2, params))
    ref2 = reference_forward(x2, params)
    assert out2.shape == (B2, 1)
    err2 = float(jnp.max(jnp.abs(out2 - ref2)))
    assert err2 < 2.5e-2, f"mismatch (large batch): max abs err {err2}"

    print("KERNEL_OK")
</pallas_src>

<mosaic_0001>
module attributes {stable_mosaic.version = 11 : i64} {
  func.func @discriminator_kernel(%arg0: i32, %arg1: memref<32x784xf32, #tpu.memory_space<vmem>>, %arg2: memref<784x256xbf16, #tpu.memory_space<vmem>>, %arg3: memref<1x256xf32, #tpu.memory_space<vmem>>, %arg4: memref<256x256xbf16, #tpu.memory_space<vmem>>, %arg5: memref<1x256xf32, #tpu.memory_space<vmem>>, %arg6: memref<1x256xf32, #tpu.memory_space<vmem>>, %arg7: memref<1x1xf32, #tpu.memory_space<smem>>, %arg8: memref<32x1xf32, #tpu.memory_space<vmem>>) attributes {dimension_semantics = [#tpu.dimension_semantics<parallel>], iteration_bounds = array<i64: 1>, scalar_prefetch = 0 : i64, scratch_operands = 0 : i64, tpu.core_type = #tpu.core_type<tc>, window_params = [{transform_indices = @transform_0, window_bounds = array<i64: 32, 784>}, {pipeline_mode = #tpu.pipeline_mode<synchronous>, transform_indices = @transform_1, window_bounds = array<i64: 784, 256>}, {pipeline_mode = #tpu.pipeline_mode<synchronous>, transform_indices = @transform_2, window_bounds = array<i64: 1, 256>}, {pipeline_mode = #tpu.pipeline_mode<synchronous>, transform_indices = @transform_3, window_bounds = array<i64: 256, 256>}, {pipeline_mode = #tpu.pipeline_mode<synchronous>, transform_indices = @transform_4, window_bounds = array<i64: 1, 256>}, {pipeline_mode = #tpu.pipeline_mode<synchronous>, transform_indices = @transform_5, window_bounds = array<i64: 1, 256>}, {transform_indices = @transform_6, window_bounds = array<i64: 1, 1>}, {transform_indices = @transform_7, window_bounds = array<i64: 32, 1>}]} {
    %c0 = arith.constant 0 : index
    %c0_0 = arith.constant 0 : index
    %0 = vector.load %arg1[%c0, %c0_0] : memref<32x784xf32, #tpu.memory_space<vmem>>, vector<32x784xf32>
    %1 = arith.truncf %0 : vector<32x784xf32> to vector<32x784xbf16>
    %c0_1 = arith.constant 0 : index
    %c0_2 = arith.constant 0 : index
    %2 = vector.load %arg2[%c0_1, %c0_2] : memref<784x256xbf16, #tpu.memory_space<vmem>>, vector<784x256xbf16>
    %cst = arith.constant dense<0.000000e+00> : vector<32x256xf32>
    %3 = tpu.matmul %1, %2, %cst {dimension_numbers = #tpu.dot_dimension_numbers<[1], [0], [0], [1], [0, 0, 1, 1], [], []>} : vector<32x784xbf16>, vector<784x256xbf16>, vector<32x256xf32> -> vector<32x256xf32>
    %c0_3 = arith.constant 0 : index
    %c0_4 = arith.constant 0 : index
    %4 = vector.load %arg3[%c0_3, %c0_4] : memref<1x256xf32, #tpu.memory_space<vmem>>, vector<1x256xf32>
    %5 = vector.broadcast %4 : vector<1x256xf32> to vector<32x256xf32>
    %6 = arith.addf %3, %5 : vector<32x256xf32>
    %cst_5 = arith.constant 0.000000e+00 : f32
    %7 = vector.broadcast %cst_5 : f32 to vector<32x256xf32>
    %8 = arith.cmpf ogt, %6, %7 : vector<32x256xf32>
    %cst_6 = arith.constant 2.000000e-01 : f32
    %9 = vector.broadcast %cst_6 : f32 to vector<32x256xf32>
    %10 = arith.mulf %9, %6 : vector<32x256xf32>
    %11 = arith.select %8, %6, %10 : vector<32x256xi1>, vector<32x256xf32>
    %12 = arith.truncf %11 : vector<32x256xf32> to vector<32x256xbf16>
    %c0_7 = arith.constant 0 : index
    %c0_8 = arith.constant 0 : index
    %13 = vector.load %arg4[%c0_7, %c0_8] : memref<256x256xbf16, #tpu.memory_space<vmem>>, vector<256x256xbf16>
    %cst_9 = arith.constant dense<0.000000e+00> : vector<32x256xf32>
    %14 = tpu.matmul %12, %13, %cst_9 {dimension_numbers = #tpu.dot_dimension_numbers<[1], [0], [0], [1], [0, 0, 1, 1], [], []>} : vector<32x256xbf16>, vector<256x256xbf16>, vector<32x256xf32> -> vector<32x256xf32>
    %c0_10 = arith.constant 0 : index
    %c0_11 = arith.constant 0 : index
    %15 = vector.load %arg5[%c0_10, %c0_11] : memref<1x256xf32, #tpu.memory_space<vmem>>, vector<1x256xf32>
    %16 = vector.broadcast %15 : vector<1x256xf32> to vector<32x256xf32>
    %17 = arith.addf %14, %16 : vector<32x256xf32>
    %cst_12 = arith.constant 0.000000e+00 : f32
    %18 = vector.broadcast %cst_12 : f32 to vector<32x256xf32>
    %19 = arith.cmpf ogt, %17, %18 : vector<32x256xf32>
    %cst_13 = arith.constant 2.000000e-01 : f32
    %20 = vector.broadcast %cst_13 : f32 to vector<32x256xf32>
    %21 = arith.mulf %20, %17 : vector<32x256xf32>
    %22 = arith.select %19, %17, %21 : vector<32x256xi1>, vector<32x256xf32>
    %c0_14 = arith.constant 0 : index
    %c0_15 = arith.constant 0 : index
    %23 = vector.load %arg6[%c0_14, %c0_15] : memref<1x256xf32, #tpu.memory_space<vmem>>, vector<1x256xf32>
    %24 = vector.broadcast %23 : vector<1x256xf32> to vector<32x256xf32>
    %25 = arith.mulf %22, %24 : vector<32x256xf32>
    %cst_16 = arith.constant dense<0.000000e+00> : vector<32xf32>
    %26 = vector.multi_reduction <add>, %25, %cst_16 [1] : vector<32x256xf32> to vector<32xf32>
    %27 = vector.shape_cast %26 : vector<32xf32> to vector<32x1xf32>
    %c0_17 = arith.constant 0 : index
    %c0_18 = arith.constant 0 : index
    %28 = memref.load %arg7[%c0_17, %c0_18] : memref<1x1xf32, #tpu.memory_space<smem>>
    %29 = vector.broadcast %28 : f32 to vector<32x1xf32>
    %30 = arith.addf %27, %29 : vector<32x1xf32>
    %31 = arith.negf %30 : vector<32x1xf32>
    %32 = math.exp %31 : vector<32x1xf32>
    %cst_19 = arith.constant 1.000000e+00 : f32
    %33 = vector.broadcast %cst_19 : f32 to vector<32x1xf32>
    %34 = arith.addf %33, %32 : vector<32x1xf32>
    %35 = arith.divf %33, %34 : vector<32x1xf32>
    %c0_20 = arith.constant 0 : index
    %c0_21 = arith.constant 0 : index
    %36 = vector.load %arg8[%c0_20, %c0_21] : memref<32x1xf32, #tpu.memory_space<vmem>>, vector<32x1xf32>
    tpu.vector_store %arg8[%c0_20, %c0_21], %35 {strides = array<i32>} : memref<32x1xf32, #tpu.memory_space<vmem>>, vector<32x1xf32>,
    return
  }
  func.func @transform_0(%arg0: i32) -> (i32, i32) {
    %c0_i32 = arith.constant 0 : i32
    %c0_i32_0 = arith.constant 0 : i32
    return %arg0, %c0_i32 : i32, i32
  }
  func.func @transform_1(%arg0: i32) -> (i32, i32) {
    %c0_i32 = arith.constant 0 : i32
    %c0_i32_0 = arith.constant 0 : i32
    %c0_i32_1 = arith.constant 0 : i32
    return %c0_i32, %c0_i32_0 : i32, i32
  }
  func.func @transform_2(%arg0: i32) -> (i32, i32) {
    %c0_i32 = arith.constant 0 : i32
    %c0_i32_0 = arith.constant 0 : i32
    %c0_i32_1 = arith.constant 0 : i32
    return %c0_i32, %c0_i32_0 : i32, i32
  }
  func.func @transform_3(%arg0: i32) -> (i32, i32) {
    %c0_i32 = arith.constant 0 : i32
    %c0_i32_0 = arith.constant 0 : i32
    %c0_i32_1 = arith.constant 0 : i32
    return %c0_i32, %c0_i32_0 : i32, i32
  }
  func.func @transform_4(%arg0: i32) -> (i32, i32) {
    %c0_i32 = arith.constant 0 : i32
    %c0_i32_0 = arith.constant 0 : i32
    %c0_i32_1 = arith.constant 0 : i32
    return %c0_i32, %c0_i32_0 : i32, i32
  }
  func.func @transform_5(%arg0: i32) -> (i32, i32) {
    %c0_i32 = arith.constant 0 : i32
    %c0_i32_0 = arith.constant 0 : i32
    %c0_i32_1 = arith.constant 0 : i32
    return %c0_i32, %c0_i32_0 : i32, i32
  }
  func.func @transform_6(%arg0: i32) -> (i32, i32) {
    %c0_i32 = arith.constant 0 : i32
    %c0_i32_0 = arith.constant 0 : i32
    %c0_i32_1 = arith.constant 0 : i32
    return %c0_i32, %c0_i32_0 : i32, i32
  }
  func.func @transform_7(%arg0: i32) -> (i32, i32) {
    %c0_i32 = arith.constant 0 : i32
    %c0_i32_0 = arith.constant 0 : i32
    return %arg0, %c0_i32 : i32, i32
  }
}

</mosaic_0001>

<llo_original>
// kernel: tpu_custom_call.1
$region0: #{tpu_custom_call.1}
  #allocation0 [shape = 'u32[]', space=smem, size = 0x4, offset = 0x4, fixed_abs, tag = 'smem constant byte address 0x4 - core index']
  #allocation1 [shape = 'u32[144,128]{1,0:T(1,128)}', space=vmem, size = 0x12000, scoped, tag = 'internal scratch']
  #allocation2 [shape = 'f32[1,1]{1,0:T(1,128)S(6)}', space=smem, size = 0x200, scoped, tag = 'scoped memory for tpu_custom_call.1']
  %s0 = inlined_call_operand.hbm [shape: f32[32,784], index: 0, kind: input, shape index: {}]
  %s1 = inlined_call_operand.hbm [shape: bf16[784,256], index: 1, kind: input, shape index: {}]
  %s2 = inlined_call_operand.vmem [shape: f32[1,256], index: 2, kind: input, shape index: {}]
  %s3 = inlined_call_operand.hbm [shape: bf16[256,256], index: 3, kind: input, shape index: {}]
  %s4 = inlined_call_operand.vmem [shape: f32[1,256], index: 4, kind: input, shape index: {}]
  %s5 = inlined_call_operand.vmem [shape: f32[1,256], index: 5, kind: input, shape index: {}]
  %s6 = inlined_call_operand.<no memory space> [shape: f32[1,1], index: 6, kind: input, shape index: {}]
  %s7 = inlined_call_operand.vmem [shape: f32[32,1], index: 7, kind: output, shape index: {}]
  %s8 = sld [smem:[#allocation0]]
  $region50: #{tpu_custom_call.1} parent=0
    _
  %s10 = ssub.s32 1, %s8
  %s11 = scalar_select 0, %s10, %s8
  %12 = sst [smem:[#allocation2]] %s6
  $region1: #{tpu_custom_call.1} parent=0
    #allocation3 [shape = 'u8[114688]{0}', space=vmem, size = 0x1c000, scoped, tag = 'input window, operand 0, single buffered']
    #allocation4 [shape = 's32[1]{0}', space=sflag, size = 0x4, scoped, tag = 'scoped memory for tpu_custom_call.1']
    #allocation5 [shape = 'u8[401408]{0}', space=vmem, size = 0x62000, scoped, tag = 'input window, operand 1, single buffered']
    #allocation6 [shape = 's32[1]{0}', space=sflag, size = 0x4, scoped, tag = 'scoped memory for tpu_custom_call.1']
    #allocation7 [shape = 'u8[131072]{0}', space=vmem, size = 0x20000, scoped, tag = 'input window, operand 3, single buffered']
    %13 = vsyncpa [#allocation4], 0
    %14 = vsyncpa [#allocation6], 0
    // Predicated region
    $region2: #{tpu_custom_call.1} parent=1 // pred_check
      _
    $region3: #{tpu_custom_call.1} parent=1 // pred_check_branch
      %16 = sbr.rel (0) target = $region5
    $region4: #{tpu_custom_call.1} parent=1 // pred_region
      %s18 = ssub.s32 3584, 3584
      %19 = vsyncadd [#allocation4], %s18
      %s20 = sshll.u32 [#allocation3], 4
      %s21 = int_to_ptr.vmem [resolvable:$true] %s20
      %26 = dma.hbm_to_vmem [thread:$0]  %s0, 3584, %s21, [#allocation4], 896, 896, 56
    $region5: #{tpu_custom_call.1} parent=1 // pred_fallthru
      _
    // Predicated region
    $region6: #{tpu_custom_call.1} parent=1 // pred_check
      _
    $region7: #{tpu_custom_call.1} parent=1 // pred_check_branch
      %28 = sbr.rel (0) target = $region9
    $region8: #{tpu_custom_call.1} parent=1 // pred_region
      %s30 = ssub.s32 12544, 12544
      %31 = vsyncadd [#allocation6], %s30
      %s32 = sshll.u32 [#allocation5], 4
      %s33 = int_to_ptr.vmem [resolvable:$true] %s32
      %38 = dma.hbm_to_vmem [thread:$0]  %s1, 12544, %s33, [#allocation6], 128, 128, 8
    $region9: #{tpu_custom_call.1} parent=1 // pred_fallthru
      _
    // Predicated region
    $region10: #{tpu_custom_call.1} parent=1 // pred_check
      _
    $region11: #{tpu_custom_call.1} parent=1 // pred_check_branch
      %40 = sbr.rel (0) target = $region13
    $region12: #{tpu_custom_call.1} parent=1 // pred_region
      _
    $region13: #{tpu_custom_call.1} parent=1 // pred_fallthru
      _
    // Predicated region
    $region14: #{tpu_custom_call.1} parent=1 // pred_check
      _
    $region15: #{tpu_custom_call.1} parent=1 // pred_check_branch
      %42 = sbr.rel (0) target = $region17
    $region16: #{tpu_custom_call.1} parent=1 // pred_region
      %s44 = ssub.s32 4096, 4096
      %45 = vsyncadd [#allocation6], %s44
      %s46 = sshll.u32 [#allocation7], 4
      %s47 = int_to_ptr.vmem [resolvable:$true] %s46
      %52 = dma.hbm_to_vmem [thread:$0]  %s3, 4096, %s47, [#allocation6], 128, 128, 8
    $region17: #{tpu_custom_call.1} parent=1 // pred_fallthru
      _
    // Predicated region
    $region18: #{tpu_custom_call.1} parent=1 // pred_check
      _
    $region19: #{tpu_custom_call.1} parent=1 // pred_check_branch
      %54 = sbr.rel (0) target = $region21
    $region20: #{tpu_custom_call.1} parent=1 // pred_region
      _
    $region21: #{tpu_custom_call.1} parent=1 // pred_fallthru
      _
    // Predicated region
    $region22: #{tpu_custom_call.1} parent=1 // pred_check
      _
    $region23: #{tpu_custom_call.1} parent=1 // pred_check_branch
      %56 = sbr.rel (0) target = $region25
    $region24: #{tpu_custom_call.1} parent=1 // pred_region
      _
    $region25: #{tpu_custom_call.1} parent=1 // pred_fallthru
      _
    // Predicated region
    $region26: #{tpu_custom_call.1} parent=1 // pred_check
      _
    $region27: #{tpu_custom_call.1} parent=1 // pred_check_branch
      %58 = sbr.rel (0) target = $region29
    $region28: #{tpu_custom_call.1} parent=1 // pred_region
      _
    $region29: #{tpu_custom_call.1} parent=1 // pred_fallthru
      _
    // Predicated region
    $region30: #{tpu_custom_call.1} parent=1 // pred_check
      _
    $region31: #{tpu_custom_call.1} parent=1 // pred_check_branch
      %60 = sbr.rel (0) target = $region33
    $region32: #{tpu_custom_call.1} parent=1 // pred_region
      %61 = dma.done [#allocation4], 3584
    $region33: #{tpu_custom_call.1} parent=1 // pred_fallthru
      _
    // Predicated region
    $region34: #{tpu_custom_call.1} parent=1 // pred_check
      _
    $region35: #{tpu_custom_call.1} parent=1 // pred_check_branch
      %63 = sbr.rel (0) target = $region37
    $region36: #{tpu_custom_call.1} parent=1 // pred_region
      %64 = dma.done [#allocation6], 12544
    $region37: #{tpu_custom_call.1} parent=1 // pred_fallthru
      _
    // Predicated region
    $region38: #{tpu_custom_call.1} parent=1 // pred_check
      _
    $region39: #{tpu_custom_call.1} parent=1 // pred_check_branch
      %66 = sbr.rel (0) target = $region41
    $region40: #{tpu_custom_call.1} parent=1 // pred_region
      %67 = dma.done [#allocation6], 4096
    $region41: #{tpu_custom_call.1} parent=1 // pred_fallthru
      _
    %v69 = vld [vmem:[#allocation3] sm:$0xff]
    %v70 = vld [vmem:[#allocation3 + $0x8] sm:$0xff]
    %v71 = vld [vmem:[#allocation3 + $0x10] sm:$0xff]
    %v72 = vld [vmem:[#allocation3 + $0x18] sm:$0xff]
    %v73 = vld [vmem:[#allocation3 + $0x20] sm:$0xff]
    %v74 = vld [vmem:[#allocation3 + $0x28] sm:$0xff]
    %v75 = vld [vmem:[#allocation3 + $0x30] sm:$0xff]
    %v76 = vld [vmem:[#allocation3 + $0x38] sm:$0xff]
    %v77 = vld [vmem:[#allocation3 + $0x40] sm:$0xff]
    %v78 = vld [vmem:[#allocation3 + $0x48] sm:$0xff]
    %v79 = vld [vmem:[#allocation3 + $0x50] sm:$0xff]
    %v80 = vld [vmem:[#allocation3 + $0x58] sm:$0xff]
    %v81 = vld [vmem:[#allocation3 + $0x60] sm:$0xff]
    %v82 = vld [vmem:[#allocation3 + $0x68] sm:$0xff]
    %v83 = vld [vmem:[#allocation3 + $0x70] sm:$0xff]
    %v84 = vld [vmem:[#allocation3 + $0x78] sm:$0xff]
    %v85 = vld [vmem:[#allocation3 + $0x80] sm:$0xff]
    %v86 = vld [vmem:[#allocation3 + $0x88] sm:$0xff]
    %v87 = vld [vmem:[#allocation3 + $0x90] sm:$0xff]
    %v88 = vld [vmem:[#allocation3 + $0x98] sm:$0xff]
    %v89 = vld [vmem:[#allocation3 + $0xa0] sm:$0xff]
    %v90 = vld [vmem:[#allocation3 + $0xa8] sm:$0xff]
    %v91 = vld [vmem:[#allocation3 + $0xb0] sm:$0xff]
    %v92 = vld [vmem:[#allocation3 + $0xb8] sm:$0xff]
    %v93 = vld [vmem:[#allocation3 + $0xc0] sm:$0xff]
    %v94 = vld [vmem:[#allocation3 + $0xc8] sm:$0xff]
    %v95 = vld [vmem:[#allocation3 + $0xd0] sm:$0xff]
    %v96 = vld [vmem:[#allocation3 + $0xd8] sm:$0xff]
    %v97 = vpack.c.bf16 %v76, %v69
    %v98 = vpack.c.bf16 %v77, %v70
    %v99 = vpack.c.bf16 %v78, %v71
    %v100 = vpack.c.bf16 %v79, %v72
    %v101 = vpack.c.bf16 %v80, %v73
    %v102 = vpack.c.bf16 %v81, %v74
    %v103 = vpack.c.bf16 %v82, %v75
    %v104 = vpack.c.bf16 %v90, %v83
    %v105 = vpack.c.bf16 %v91, %v84
    %v106 = vpack.c.bf16 %v92, %v85
    %v107 = vpack.c.bf16 %v93, %v86
    %v108 = vpack.c.bf16 %v94, %v87
    %v109 = vpack.c.bf16 %v95, %v88
    %v110 = vpack.c.bf16 %v96, %v89
    %v111 = vld [vmem:[#allocation5] sm:$0xff]
    %v112 = vld [vmem:[#allocation5 + $0x8] sm:$0xff]
    %v113 = vld [vmem:[#allocation5 + $0x10] sm:$0xff]
    %v114 = vld [vmem:[#allocation5 + $0x18] sm:$0xff]
    %v115 = vld [vmem:[#allocation5 + $0x20] sm:$0xff]
    %v116 = vld [vmem:[#allocation5 + $0x28] sm:$0xff]
    %v117 = vld [vmem:[#allocation5 + $0x30] sm:$0xff]
    %v118 = vld [vmem:[#allocation5 + $0x38] sm:$0xff]
    %v119 = vld [vmem:[#allocation5 + $0x40] sm:$0xff]
    %v120 = vld [vmem:[#allocation5 + $0x48] sm:$0xff]
    %v121 = vld [vmem:[#allocation5 + $0x50] sm:$0xff]
    %v122 = vld [vmem:[#allocation5 + $0x58] sm:$0xff]
    %v123 = vld [vmem:[#allocation5 + $0x60] sm:$0xff]
    %v124 = vld [vmem:[#allocation5 + $0x68] sm:$0xff]
    %v125 = vld [vmem:[#allocation5 + $0x70] sm:$0xff]
    %v126 = vld [vmem:[#allocation5 + $0x78] sm:$0xff]
    %v127 = vld [vmem:[#allocation5 + $0x80] sm:$0xff]
    %v128 = vld [vmem:[#allocation5 + $0x88] sm:$0xff]
    %v129 = vld [vmem:[#allocation5 + $0x90] sm:$0xff]
    %v130 = vld [vmem:[#allocation5 + $0x98] sm:$0xff]
    %v131 = vld [vmem:[#allocation5 + $0xa0] sm:$0xff]
    %v132 = vld [vmem:[#allocation5 + $0xa8] sm:$0xff]
    %v133 = vld [vmem:[#allocation5 + $0xb0] sm:$0xff]
    %v134 = vld [vmem:[#allocation5 + $0xb8] sm:$0xff]
    %v135 = vld [vmem:[#allocation5 + $0xc0] sm:$0xff]
    %v136 = vld [vmem:[#allocation5 + $0xc8] sm:$0xff]
    %v137 = vld [vmem:[#allocation5 + $0xd0] sm:$0xff]
    %v138 = vld [vmem:[#allocation5 + $0xd8] sm:$0xff]
    %v139 = vld [vmem:[#allocation5 + $0xe0] sm:$0xff]
    %v140 = vld [vmem:[#allocation5 + $0xe8] sm:$0xff]
    %v141 = vld [vmem:[#allocation5 + $0xf0] sm:$0xff]
    %v142 = vld [vmem:[#allocation5 + $0xf8] sm:$0xff]
    %v143 = vld [vmem:[#allocation5 + $0x100] sm:$0xff]
    %v144 = vld [vmem:[#allocation5 + $0x108] sm:$0xff]
    %v145 = vld [vmem:[#allocation5 + $0x110] sm:$0xff]
    %v146 = vld [vmem:[#allocation5 + $0x118] sm:$0xff]
    %v147 = vld [vmem:[#allocation5 + $0x120] sm:$0xff]
    %v148 = vld [vmem:[#allocation5 + $0x128] sm:$0xff]
    %v149 = vld [vmem:[#allocation5 + $0x130] sm:$0xff]
    %v150 = vld [vmem:[#allocation5 + $0x138] sm:$0xff]
    %v151 = vld [vmem:[#allocation5 + $0x140] sm:$0xff]
    %v152 = vld [vmem:[#allocation5 + $0x148] sm:$0xff]
    %v153 = vld [vmem:[#allocation5 + $0x150] sm:$0xff]
    %v154 = vld [vmem:[#allocation5 + $0x158] sm:$0xff]
    %v155 = vld [vmem:[#allocation5 + $0x160] sm:$0xff]
    %v156 = vld [vmem:[#allocation5 + $0x168] sm:$0xff]
    %v157 = vld [vmem:[#allocation5 + $0x170] sm:$0xff]
    %v158 = vld [vmem:[#allocation5 + $0x178] sm:$0xff]
    %v159 = vld [vmem:[#allocation5 + $0x180] sm:$0xff]
    %v160 = vld [vmem:[#allocation5 + $0x188] sm:$0xff]
    %v161 = vld [vmem:[#allocation5 + $0x190] sm:$0xff]
    %v162 = vld [vmem:[#allocation5 + $0x198] sm:$0xff]
    %v163 = vld [vmem:[#allocation5 + $0x1a0] sm:$0xff]
    %v164 = vld [vmem:[#allocation5 + $0x1a8] sm:$0xff]
    %v165 = vld [vmem:[#allocation5 + $0x1b0] sm:$0xff]
    %v166 = vld [vmem:[#allocation5 + $0x1b8] sm:$0xff]
    %v167 = vld [vmem:[#allocation5 + $0x1c0] sm:$0xff]
    %v168 = vld [vmem:[#allocation5 + $0x1c8] sm:$0xff]
    %v169 = vld [vmem:[#allocation5 + $0x1d0] sm:$0xff]
    %v170 = vld [vmem:[#allocation5 + $0x1d8] sm:$0xff]
    %v171 = vld [vmem:[#allocation5 + $0x1e0] sm:$0xff]
    %v172 = vld [vmem:[#allocation5 + $0x1e8] sm:$0xff]
    %v173 = vld [vmem:[#allocation5 + $0x1f0] sm:$0xff]
    %v174 = vld [vmem:[#allocation5 + $0x1f8] sm:$0xff]
    %v175 = vld [vmem:[#allocation5 + $0x200] sm:$0xff]
    %v176 = vld [vmem:[#allocation5 + $0x208] sm:$0xff]
    %v177 = vld [vmem:[#allocation5 + $0x210] sm:$0xff]
    %v178 = vld [vmem:[#allocation5 + $0x218] sm:$0xff]
    %v179 = vld [vmem:[#allocation5 + $0x220] sm:$0xff]
    %v180 = vld [vmem:[#allocation5 + $0x228] sm:$0xff]
    %v181 = vld [vmem:[#allocation5 + $0x230] sm:$0xff]
    %v182 = vld [vmem:[#allocation5 + $0x238] sm:$0xff]
    %v183 = vld [vmem:[#allocation5 + $0x240] sm:$0xff]
    %v184 = vld [vmem:[#allocation5 + $0x248] sm:$0xff]
    %v185 = vld [vmem:[#allocation5 + $0x250] sm:$0xff]
    %v186 = vld [vmem:[#allocation5 + $0x258] sm:$0xff]
    %v187 = vld [vmem:[#allocation5 + $0x260] sm:$0xff]
    %v188 = vld [vmem:[#allocation5 + $0x268] sm:$0xff]
    %v189 = vld [vmem:[#allocation5 + $0x270] sm:$0xff]
    %v190 = vld [vmem:[#allocation5 + $0x278] sm:$0xff]
    %v191 = vld [vmem:[#allocation5 + $0x280] sm:$0xff]
    %v192 = vld [vmem:[#allocation5 + $0x288] sm:$0xff]
    %v193 = vld [vmem:[#allocation5 + $0x290] sm:$0xff]
    %v194 = vld [vmem:[#allocation5 + $0x298] sm:$0xff]
    %v195 = vld [vmem:[#allocation5 + $0x2a0] sm:$0xff]
    %v196 = vld [vmem:[#allocation5 + $0x2a8] sm:$0xff]
    %v197 = vld [vmem:[#allocation5 + $0x2b0] sm:$0xff]
    %v198 = vld [vmem:[#allocation5 + $0x2b8] sm:$0xff]
    %v199 = vld [vmem:[#allocation5 + $0x2c0] sm:$0xff]
    %v200 = vld [vmem:[#allocation5 + $0x2c8] sm:$0xff]
    %v201 = vld [vmem:[#allocation5 + $0x2d0] sm:$0xff]
    %v202 = vld [vmem:[#allocation5 + $0x2d8] sm:$0xff]
    %v203 = vld [vmem:[#allocation5 + $0x2e0] sm:$0xff]
    %v204 = vld [vmem:[#allocation5 + $0x2e8] sm:$0xff]
    %v205 = vld [vmem:[#allocation5 + $0x2f0] sm:$0xff]
    %v206 = vld [vmem:[#allocation5 + $0x2f8] sm:$0xff]
    %v207 = vld [vmem:[#allocation5 + $0x300] sm:$0xff]
    %v208 = vld [vmem:[#allocation5 + $0x308] sm:$0xff]
    %v209 = vld [vmem:[%s2] sm:$0x3]
    %v211 = vlaneseq
    %v212 = vshrl.u32 %v211, 7
    %v213 = vsub.s32 0, %v212
    %v214 = vrot.slane %v209, %v213
    %v215 = vlaneseq
    %v216 = vshrl.u32 %v215, 7
    %v217 = vsub.s32 1, %v216
    %v218 = vrot.slane %v209, %v217
    %v319 = vunpack.c.l.b16 %v111
    %v320 = vunpack.c.h.b16 %v111
    %v321 = vunpack.c.l.b16 %v112
    %v322 = vunpack.c.h.b16 %v112
    %v323 = vunpack.c.l.b16 %v113
    %v324 = vunpack.c.h.b16 %v113
    %v325 = vunpack.c.l.b16 %v114
    %v326 = vunpack.c.h.b16 %v114
    %v327 = vunpack.c.l.b16 %v115
    %v328 = vunpack.c.h.b16 %v115
    %v329 = vunpack.c.l.b16 %v116
    %v330 = vunpack.c.h.b16 %v116
    %v331 = vunpack.c.l.b16 %v117
    %v332 = vunpack.c.h.b16 %v117
    %v333 = vunpack.c.l.b16 %v118
    %v334 = vunpack.c.h.b16 %v118
    %v335 = vunpack.c.l.b16 %v119
    %v336 = vunpack.c.h.b16 %v119
    %v337 = vunpack.c.l.b16 %v120
    %v338 = vunpack.c.h.b16 %v120
    %v339 = vunpack.c.l.b16 %v121
    %v340 = vunpack.c.h.b16 %v121
    %v341 = vunpack.c.l.b16 %v122
    %v342 = vunpack.c.h.b16 %v122
    %v343 = vunpack.c.l.b16 %v123
    %v344 = vunpack.c.h.b16 %v123
    %v345 = vunpack.c.l.b16 %v124
    %v346 = vunpack.c.h.b16 %v124
    %v347 = vunpack.c.l.b16 %v125
    %v348 = vunpack.c.h.b16 %v125
    %v349 = vunpack.c.l.b16 %v126
    %v350 = vunpack.c.h.b16 %v126
    %v351 = vunpack.c.l.b16 %v127
    %v352 = vunpack.c.h.b16 %v127
    %v353 = vunpack.c.l.b16 %v128
    %v354 = vunpack.c.h.b16 %v128
    %v355 = vunpack.c.l.b16 %v129
    %v356 = vunpack.c.h.b16 %v129
    %v357 = vunpack.c.l.b16 %v130
    %v358 = vunpack.c.h.b16 %v130
    %v359 = vunpack.c.l.b16 %v131
    %v360 = vunpack.c.h.b16 %v131
    %v361 = vunpack.c.l.b16 %v132
    %v362 = vunpack.c.h.b16 %v132
    %v363 = vunpack.c.l.b16 %v133
    %v364 = vunpack.c.h.b16 %v133
    %v365 = vunpack.c.l.b16 %v134
    %v366 = vunpack.c.h.b16 %v134
    %v367 = vunpack.c.l.b16 %v135
    %v368 = vunpack.c.h.b16 %v135
    %v369 = vunpack.c.l.b16 %v136
    %v370 = vunpack.c.h.b16 %v136
    %v371 = vunpack.c.l.b16 %v137
    %v372 = vunpack.c.h.b16 %v137
    %v373 = vunpack.c.l.b16 %v138
    %v374 = vunpack.c.h.b16 %v138
    %v375 = vunpack.c.l.b16 %v139
    %v376 = vunpack.c.h.b16 %v139
    %v377 = vunpack.c.l.b16 %v140
    %v378 = vunpack.c.h.b16 %v140
    %v379 = vunpack.c.l.b16 %v141
    %v380 = vunpack.c.h.b16 %v141
    %v381 = vunpack.c.l.b16 %v142
    %v382 = vunpack.c.h.b16 %v142
    %v383 = vunpack.c.l.b16 %v143
    %v384 = vunpack.c.h.b16 %v143
    %v385 = vunpack.c.l.b16 %v144
    %v386 = vunpack.c.h.b16 %v144
    %v387 = vunpack.c.l.b16 %v145
    %v388 = vunpack.c.h.b16 %v145
    %v389 = vunpack.c.l.b16 %v146
    %v390 = vunpack.c.h.b16 %v146
    %v391 = vunpack.c.l.b16 %v147
    %v392 = vunpack.c.h.b16 %v147
    %v393 = vunpack.c.l.b16 %v148
    %v394 = vunpack.c.h.b16 %v148
    %v395 = vunpack.c.l.b16 %v149
    %v396 = vunpack.c.h.b16 %v149
    %v397 = vunpack.c.l.b16 %v150
    %v398 = vunpack.c.h.b16 %v150
    %v399 = vunpack.c.l.b16 %v151
    %v400 = vunpack.c.h.b16 %v151
    %v401 = vunpack.c.l.b16 %v152
    %v402 = vunpack.c.h.b16 %v152
    %v403 = vunpack.c.l.b16 %v153
    %v404 = vunpack.c.h.b16 %v153
    %v405 = vunpack.c.l.b16 %v154
    %v406 = vunpack.c.h.b16 %v154
    %v407 = vunpack.c.l.b16 %v155
    %v408 = vunpack.c.h.b16 %v155
    %v409 = vunpack.c.l.b16 %v156
    %v410 = vunpack.c.h.b16 %v156
    %v411 = vunpack.c.l.b16 %v157
    %v412 = vunpack.c.h.b16 %v157
    %v413 = vunpack.c.l.b16 %v158
    %v414 = vunpack.c.h.b16 %v158
    %v415 = vunpack.c.l.b16 %v159
    %v416 = vunpack.c.h.b16 %v159
    %v417 = vunpack.c.l.b16 %v160
    %v418 = vunpack.c.h.b16 %v160
    %v419 = vunpack.c.l.b16 %v161
    %v420 = vunpack.c.h.b16 %v161
    %v421 = vunpack.c.l.b16 %v162
    %v422 = vunpack.c.h.b16 %v162
    %v423 = vunpack.c.l.b16 %v163
    %v424 = vunpack.c.h.b16 %v163
    %v425 = vunpack.c.l.b16 %v164
    %v426 = vunpack.c.h.b16 %v164
    %v427 = vunpack.c.l.b16 %v165
    %v428 = vunpack.c.h.b16 %v165
    %v429 = vunpack.c.l.b16 %v166
    %v430 = vunpack.c.h.b16 %v166
    %v431 = vunpack.c.l.b16 %v167
    %v432 = vunpack.c.h.b16 %v167
    %v433 = vunpack.c.l.b16 %v168
    %v434 = vunpack.c.h.b16 %v168
    %v435 = vunpack.c.l.b16 %v169
    %v436 = vunpack.c.h.b16 %v169
    %v437 = vunpack.c.l.b16 %v170
    %v438 = vunpack.c.h.b16 %v170
    %v439 = vunpack.c.l.b16 %v171
    %v440 = vunpack.c.h.b16 %v171
    %v441 = vunpack.c.l.b16 %v172
    %v442 = vunpack.c.h.b16 %v172
    %v443 = vunpack.c.l.b16 %v173
    %v444 = vunpack.c.h.b16 %v173
    %v445 = vunpack.c.l.b16 %v174
    %v446 = vunpack.c.h.b16 %v174
    %v447 = vunpack.c.l.b16 %v175
    %v448 = vunpack.c.h.b16 %v175
    %v449 = vunpack.c.l.b16 %v176
    %v450 = vunpack.c.h.b16 %v176
    %v451 = vunpack.c.l.b16 %v177
    %v452 = vunpack.c.h.b16 %v177
    %v453 = vunpack.c.l.b16 %v178
    %v454 = vunpack.c.h.b16 %v178
    %v455 = vunpack.c.l.b16 %v179
    %v456 = vunpack.c.h.b16 %v179
    %v457 = vunpack.c.l.b16 %v180
    %v458 = vunpack.c.h.b16 %v180
    %v459 = vunpack.c.l.b16 %v181
    %v460 = vunpack.c.h.b16 %v181
    %v461 = vunpack.c.l.b16 %v182
    %v462 = vunpack.c.h.b16 %v182
    %v463 = vunpack.c.l.b16 %v183
    %v464 = vunpack.c.h.b16 %v183
    %v465 = vunpack.c.l.b16 %v184
    %v466 = vunpack.c.h.b16 %v184
    %v467 = vunpack.c.l.b16 %v185
    %v468 = vunpack.c.h.b16 %v185
    %v469 = vunpack.c.l.b16 %v186
    %v470 = vunpack.c.h.b16 %v186
    %v471 = vunpack.c.l.b16 %v187
    %v472 = vunpack.c.h.b16 %v187
    %v473 = vunpack.c.l.b16 %v188
    %v474 = vunpack.c.h.b16 %v188
    %v475 = vunpack.c.l.b16 %v189
    %v476 = vunpack.c.h.b16 %v189
    %v477 = vunpack.c.l.b16 %v190
    %v478 = vunpack.c.h.b16 %v190
    %v479 = vunpack.c.l.b16 %v191
    %v480 = vunpack.c.h.b16 %v191
    %v481 = vunpack.c.l.b16 %v192
    %v482 = vunpack.c.h.b16 %v192
    %v483 = vunpack.c.l.b16 %v193
    %v484 = vunpack.c.h.b16 %v193
    %v485 = vunpack.c.l.b16 %v194
    %v486 = vunpack.c.h.b16 %v194
    %v487 = vunpack.c.l.b16 %v195
    %v488 = vunpack.c.h.b16 %v195
    %v489 = vunpack.c.l.b16 %v196
    %v490 = vunpack.c.h.b16 %v196
    %v491 = vunpack.c.l.b16 %v197
    %v492 = vunpack.c.h.b16 %v197
    %v493 = vunpack.c.l.b16 %v198
    %v494 = vunpack.c.h.b16 %v198
    %v495 = vunpack.c.l.b16 %v199
    %v496 = vunpack.c.h.b16 %v199
    %v497 = vunpack.c.l.b16 %v200
    %v498 = vunpack.c.h.b16 %v200
    %v499 = vunpack.c.l.b16 %v201
    %v500 = vunpack.c.h.b16 %v201
    %v501 = vunpack.c.l.b16 %v202
    %v502 = vunpack.c.h.b16 %v202
    %v503 = vunpack.c.l.b16 %v203
    %v504 = vunpack.c.h.b16 %v203
    %v505 = vunpack.c.l.b16 %v204
    %v506 = vunpack.c.h.b16 %v204
    %v507 = vunpack.c.l.b16 %v205
    %v508 = vunpack.c.h.b16 %v205
    %v509 = vunpack.c.l.b16 %v206
    %v510 = vunpack.c.h.b16 %v206
    %v511 = vunpack.c.l.b16 %v207
    %v512 = vunpack.c.h.b16 %v207
    %v513 = vunpack.c.l.b16 %v208
    %v514 = vunpack.c.h.b16 %v208
    %v515 = vpack.c.b16 %v321, %v319
    %v516 = vpack.c.b16 %v322, %v320
    %v517 = vpack.c.b16 %v325, %v323
    %v518 = vpack.c.b16 %v326, %v324
    %v519 = vpack.c.b16 %v329, %v327
    %v520 = vpack.c.b16 %v330, %v328
    %v521 = vpack.c.b16 %v333, %v331
    %v522 = vpack.c.b16 %v334, %v332
    %v523 = vpack.c.b16 %v337, %v335
    %v524 = vpack.c.b16 %v338, %v336
    %v525 = vpack.c.b16 %v341, %v339
    %v526 = vpack.c.b16 %v342, %v340
    %v527 = vpack.c.b16 %v345, %v343
    %v528 = vpack.c.b16 %v346, %v344
    %v529 = vpack.c.b16 %v349, %v347
    %v530 = vpack.c.b16 %v350, %v348
    %v531 = vpack.c.b16 %v353, %v351
    %v532 = vpack.c.b16 %v354, %v352
    %v533 = vpack.c.b16 %v357, %v355
    %v534 = vpack.c.b16 %v358, %v356
    %v535 = vpack.c.b16 %v361, %v359
    %v536 = vpack.c.b16 %v362, %v360
    %v537 = vpack.c.b16 %v365, %v363
    %v538 = vpack.c.b16 %v366, %v364
    %v539 = vpack.c.b16 %v369, %v367
    %v540 = vpack.c.b16 %v370, %v368
    %v541 = vpack.c.b16 %v373, %v371
    %v542 = vpack.c.b16 %v374, %v372
    %v543 = vpack.c.b16 %v377, %v375
    %v544 = vpack.c.b16 %v378, %v376
    %v545 = vpack.c.b16 %v381, %v379
    %v546 = vpack.c.b16 %v382, %v380
    %v547 = vpack.c.b16 %v385, %v383
    %v548 = vpack.c.b16 %v386, %v384
    %v549 = vpack.c.b16 %v389, %v387
    %v550 = vpack.c.b16 %v390, %v388
    %v551 = vpack.c.b16 %v393, %v391
    %v552 = vpack.c.b16 %v394, %v392
    %v553 = vpack.c.b16 %v397, %v395
    %v554 = vpack.c.b16 %v398, %v396
    %v555 = vpack.c.b16 %v401, %v399
    %v556 = vpack.c.b16 %v402, %v400
    %v557 = vpack.c.b16 %v405, %v403
    %v558 = vpack.c.b16 %v406, %v404
    %v559 = vpack.c.b16 %v409, %v407
    %v560 = vpack.c.b16 %v410, %v408
    %v561 = vpack.c.b16 %v413, %v411
    %v562 = vpack.c.b16 %v414, %v412
    %v563 = vpack.c.b16 %v417, %v415
    %v564 = vpack.c.b16 %v418, %v416
    %v565 = vpack.c.b16 %v421, %v419
    %v566 = vpack.c.b16 %v422, %v420
    %v567 = vpack.c.b16 %v425, %v423
    %v568 = vpack.c.b16 %v426, %v424
    %v569 = vpack.c.b16 %v429, %v427
    %v570 = vpack.c.b16 %v430, %v428
    %v571 = vpack.c.b16 %v433, %v431
    %v572 = vpack.c.b16 %v434, %v432
    %v573 = vpack.c.b16 %v437, %v435
    %v574 = vpack.c.b16 %v438, %v436
    %v575 = vpack.c.b16 %v441, %v439
    %v576 = vpack.c.b16 %v442, %v440
    %v577 = vpack.c.b16 %v445, %v443
    %v578 = vpack.c.b16 %v446, %v444
    %v579 = vpack.c.b16 %v449, %v447
    %v580 = vpack.c.b16 %v450, %v448
    %v581 = vpack.c.b16 %v453, %v451
    %v582 = vpack.c.b16 %v454, %v452
    %v583 = vpack.c.b16 %v457, %v455
    %v584 = vpack.c.b16 %v458, %v456
    %v585 = vpack.c.b16 %v461, %v459
    %v586 = vpack.c.b16 %v462, %v460
    %v587 = vpack.c.b16 %v465, %v463
    %v588 = vpack.c.b16 %v466, %v464
    %v589 = vpack.c.b16 %v469, %v467
    %v590 = vpack.c.b16 %v470, %v468
    %v591 = vpack.c.b16 %v473, %v471
    %v592 = vpack.c.b16 %v474, %v472
    %v593 = vpack.c.b16 %v477, %v475
    %v594 = vpack.c.b16 %v478, %v476
    %v595 = vpack.c.b16 %v481, %v479
    %v596 = vpack.c.b16 %v482, %v480
    %v597 = vpack.c.b16 %v485, %v483
    %v598 = vpack.c.b16 %v486, %v484
    %v599 = vpack.c.b16 %v489, %v487
    %v600 = vpack.c.b16 %v490, %v488
    %v601 = vpack.c.b16 %v493, %v491
    %v602 = vpack.c.b16 %v494, %v492
    %v603 = vpack.c.b16 %v497, %v495
    %v604 = vpack.c.b16 %v498, %v496
    %v605 = vpack.c.b16 %v501, %v499
    %v606 = vpack.c.b16 %v502, %v500
    %v607 = vpack.c.b16 %v505, %v503
    %v608 = vpack.c.b16 %v506, %v504
    %v609 = vpack.c.b16 %v509, %v507
    %v610 = vpack.c.b16 %v510, %v508
    %v611 = vpack.c.b16 %v513, %v511
    %v612 = vpack.c.b16 %v514, %v512
    %vm711 = vcmask 130048
    %v713 = vsel %vm711, %v103, 0
    %v716 = vsel %vm711, %v110, 0
    %718 = vmatprep.subr.bf16.mxu0 %v516
    %719 = vmatpush1.bf16.msra.mxu0 %v515
    %720 = vmatprep.subr.bf16.mxu0 %v518
    %721 = vmatpush1.bf16.msra.mxu0 %v517
    %722 = vmatprep.subr.bf16.mxu0 %v520
    %723 = vmatpush1.bf16.msra.mxu0 %v519
    %724 = vmatprep.subr.bf16.mxu0 %v522
    %725 = vmatpush1.bf16.msra.mxu0 %v521
    %726 = vmatprep.subr.bf16.mxu0 %v524
    %727 = vmatpush1.bf16.msra.mxu0 %v523
    %728 = vmatprep.subr.bf16.mxu0 %v526
    %729 = vmatpush1.bf16.msra.mxu0 %v525
    %730 = vmatprep.subr.bf16.mxu0 %v528
    %731 = vmatpush1.bf16.msra.mxu0 %v527
    %732 = vmatprep.subr.bf16.mxu0 %v530
    %733 = vmatpush1.bf16.msra.mxu0 %v529
    %734 = vmatprep.subr.bf16.mxu0 %v532
    %735 = vmatpush1.bf16.msra.mxu0 %v531
    %736 = vmatprep.subr.bf16.mxu0 %v534
    %737 = vmatpush1.bf16.msra.mxu0 %v533
    %738 = vmatprep.subr.bf16.mxu0 %v536
    %739 = vmatpush1.bf16.msra.mxu0 %v535
    %740 = vmatprep.subr.bf16.mxu0 %v538
    %741 = vmatpush1.bf16.msra.mxu0 %v537
    %742 = vmatprep.subr.bf16.mxu0 %v540
    %743 = vmatpush1.bf16.msra.mxu0 %v539
    %744 = vmatprep.subr.bf16.mxu0 %v542
    %745 = vmatpush1.bf16.msra.mxu0 %v541
    %746 = vmatprep.subr.bf16.mxu0 %v544
    %747 = vmatpush1.bf16.msra.mxu0 %v543
    %748 = vmatprep.subr.bf16.mxu0 %v546
    %749 = vmatpush1.bf16.msra.mxu0 %v545
    %750 = vmatprep.mubr.bf16.mxu0 %v98
    %751 = vmatmul.mubr.bf16.gmra.mrb[0].mxu0 %v97
    %v752 = vpop.f32.mrb[0].mxu0
    %v753 = vadd.f32 %v214, %v752
    %v754 = vpop.f32.mrb[0].mxu0
    %v755 = vadd.f32 %v218, %v754
    %v756 = vpop.f32.mrb[0].mxu0
    %v757 = vadd.f32 %v214, %v756
    %v758 = vpop.f32.mrb[0].mxu0
    %v759 = vadd.f32 %v218, %v758
    %760 = vmatprep.mubr.bf16.mxu0 %v105
    %761 = vmatmul.mubr.bf16.gmra.mrb[0].mxu0 %v104
    %v762 = vpop.f32.mrb[0].mxu0
    %v763 = vadd.f32 %v214, %v762
    %v764 = vpop.f32.mrb[0].mxu0
    %v765 = vadd.f32 %v218, %v764
    %v766 = vpop.f32.mrb[0].mxu0
    %v767 = vadd.f32 %v214, %v766
    %v768 = vpop.f32.mrb[0].mxu0
    %v769 = vadd.f32 %v218, %v768
    %770 = vdwg.mxu0
    %771 = vmatprep.subr.bf16.mxu0 %v548
    %772 = vmatpush1.bf16.msra.mxu0 %v547
    %773 = vmatprep.subr.bf16.mxu0 %v550
    %774 = vmatpush1.bf16.msra.mxu0 %v549
    %775 = vmatprep.subr.bf16.mxu0 %v552
    %776 = vmatpush1.bf16.msra.mxu0 %v551
    %777 = vmatprep.subr.bf16.mxu0 %v554
    %778 = vmatpush1.bf16.msra.mxu0 %v553
    %779 = vmatprep.subr.bf16.mxu0 %v556
    %780 = vmatpush1.bf16.msra.mxu0 %v555
    %781 = vmatprep.subr.bf16.mxu0 %v558
    %782 = vmatpush1.bf16.msra.mxu0 %v557
    %783 = vmatprep.subr.bf16.mxu0 %v560
    %784 = vmatpush1.bf16.msra.mxu0 %v559
    %785 = vmatprep.subr.bf16.mxu0 %v562
    %786 = vmatpush1.bf16.msra.mxu0 %v561
    %787 = vmatprep.subr.bf16.mxu0 %v564
    %788 = vmatpush1.bf16.msra.mxu0 %v563
    %789 = vmatprep.subr.bf16.mxu0 %v566
    %790 = vmatpush1.bf16.msra.mxu0 %v565
    %791 = vmatprep.subr.bf16.mxu0 %v568
    %792 = vmatpush1.bf16.msra.mxu0 %v567
    %793 = vmatprep.subr.bf16.mxu0 %v570
    %794 = vmatpush1.bf16.msra.mxu0 %v569
    %795 = vmatprep.subr.bf16.mxu0 %v572
    %796 = vmatpush1.bf16.msra.mxu0 %v571
    %797 = vmatprep.subr.bf16.mxu0 %v574
    %798 = vmatpush1.bf16.msra.mxu0 %v573
    %799 = vmatprep.subr.bf16.mxu0 %v576
    %800 = vmatpush1.bf16.msra.mxu0 %v575
    %801 = vmatprep.subr.bf16.mxu0 %v578
    %802 = vmatpush1.bf16.msra.mxu0 %v577
    %803 = vmatprep.mubr.bf16.mxu0 %v100
    %804 = vmatmul.mubr.bf16.gmra.mrb[0].mxu0 %v99
    %v805 = vpop.f32.mrb[0].mxu0
    %v806 = vadd.f32 %v753, %v805
    %v807 = vpop.f32.mrb[0].mxu0
    %v808 = vadd.f32 %v755, %v807
    %v809 = vpop.f32.mrb[0].mxu0
    %v810 = vadd.f32 %v757, %v809
    %v811 = vpop.f32.mrb[0].mxu0
    %v812 = vadd.f32 %v759, %v811
    %813 = vmatprep.mubr.bf16.mxu0 %v107
    %814 = vmatmul.mubr.bf16.gmra.mrb[0].mxu0 %v106
    %v815 = vpop.f32.mrb[0].mxu0
    %v816 = vadd.f32 %v763, %v815
    %v817 = vpop.f32.mrb[0].mxu0
    %v818 = vadd.f32 %v765, %v817
    %v819 = vpop.f32.mrb[0].mxu0
    %v820 = vadd.f32 %v767, %v819
    %v821 = vpop.f32.mrb[0].mxu0
    %v822 = vadd.f32 %v769, %v821
    %823 = vdwg.mxu0
    %824 = vmatprep.subr.bf16.mxu0 %v580
    %825 = vmatpush1.bf16.msra.mxu0 %v579
    %826 = vmatprep.subr.bf16.mxu0 %v582
    %827 = vmatpush1.bf16.msra.mxu0 %v581
    %828 = vmatprep.subr.bf16.mxu0 %v584
    %829 = vmatpush1.bf16.msra.mxu0 %v583
    %830 = vmatprep.subr.bf16.mxu0 %v586
    %831 = vmatpush1.bf16.msra.mxu0 %v585
    %832 = vmatprep.subr.bf16.mxu0 %v588
    %833 = vmatpush1.bf16.msra.mxu0 %v587
    %834 = vmatprep.subr.bf16.mxu0 %v590
    %835 = vmatpush1.bf16.msra.mxu0 %v589
    %836 = vmatprep.subr.bf16.mxu0 %v592
    %837 = vmatpush1.bf16.msra.mxu0 %v591
    %838 = vmatprep.subr.bf16.mxu0 %v594
    %839 = vmatpush1.bf16.msra.mxu0 %v593
    %840 = vmatprep.subr.bf16.mxu0 %v596
    %841 = vmatpush1.bf16.msra.mxu0 %v595
    %842 = vmatprep.subr.bf16.mxu0 %v598
    %843 = vmatpush1.bf16.msra.mxu0 %v597
    %844 = vmatprep.subr.bf16.mxu0 %v600
    %845 = vmatpush1.bf16.msra.mxu0 %v599
    %846 = vmatprep.subr.bf16.mxu0 %v602
    %847 = vmatpush1.bf16.msra.mxu0 %v601
    %848 = vmatprep.subr.bf16.mxu0 %v604
    %849 = vmatpush1.bf16.msra.mxu0 %v603
    %850 = vmatprep.subr.bf16.mxu0 %v606
    %851 = vmatpush1.bf16.msra.mxu0 %v605
    %852 = vmatprep.subr.bf16.mxu0 %v608
    %853 = vmatpush1.bf16.msra.mxu0 %v607
    %854 = vmatprep.subr.bf16.mxu0 %v610
    %855 = vmatpush1.bf16.msra.mxu0 %v609
    %856 = vmatprep.mubr.bf16.mxu0 %v102
    %857 = vmatmul.mubr.bf16.gmra.mrb[0].mxu0 %v101
    %v858 = vpop.f32.mrb[0].mxu0
    %v859 = vadd.f32 %v806, %v858
    %v860 = vpop.f32.mrb[0].mxu0
    %v861 = vadd.f32 %v808, %v860
    %v862 = vpop.f32.mrb[0].mxu0
    %v863 = vadd.f32 %v810, %v862
    %v864 = vpop.f32.mrb[0].mxu0
    %v865 = vadd.f32 %v812, %v864
    %866 = vmatprep.mubr.bf16.mxu0 %v109
    %867 = vmatmul.mubr.bf16.gmra.mrb[0].mxu0 %v108
    %v868 = vpop.f32.mrb[0].mxu0
    %v869 = vadd.f32 %v816, %v868
    %v870 = vpop.f32.mrb[0].mxu0
    %v871 = vadd.f32 %v818, %v870
    %v872 = vpop.f32.mrb[0].mxu0
    %v873 = vadd.f32 %v820, %v872
    %v874 = vpop.f32.mrb[0].mxu0
    %v875 = vadd.f32 %v822, %v874
    %876 = vdwg.mxu0
    %877 = vmatprep.subr.bf16.mxu0 %v612
    %878 = vmatpush1.bf16.msra.mxu0 %v611
    %879 = vmatprep.subr.bf16.mxu0 0
    %880 = vmatpush1.bf16.msra.mxu0 0
    %881 = vmatprep.subr.bf16.mxu0 0
    %882 = vmatpush1.bf16.msra.mxu0 0
    %883 = vmatprep.subr.bf16.mxu0 0
    %884 = vmatpush1.bf16.msra.mxu0 0
    %885 = vmatprep.subr.bf16.mxu0 0
    %886 = vmatpush1.bf16.msra.mxu0 0
    %887 = vmatprep.subr.bf16.mxu0 0
    %888 = vmatpush1.bf16.msra.mxu0 0
    %889 = vmatprep.subr.bf16.mxu0 0
    %890 = vmatpush1.bf16.msra.mxu0 0
    %891 = vmatprep.subr.bf16.mxu0 0
    %892 = vmatpush1.bf16.msra.mxu0 0
    %893 = vmatprep.subr.bf16.mxu0 0
    %894 = vmatpush1.bf16.msra.mxu0 0
    %895 = vmatprep.subr.bf16.mxu0 0
    %896 = vmatpush1.bf16.msra.mxu0 0
    %897 = vmatprep.subr.bf16.mxu0 0
    %898 = vmatpush1.bf16.msra.mxu0 0
    %899 = vmatprep.subr.bf16.mxu0 0
    %900 = vmatpush1.bf16.msra.mxu0 0
    %901 = vmatprep.subr.bf16.mxu0 0
    %902 = vmatpush1.bf16.msra.mxu0 0
    %903 = vmatprep.subr.bf16.mxu0 0
    %904 = vmatpush1.bf16.msra.mxu0 0
    %905 = vmatprep.subr.bf16.mxu0 0
    %906 = vmatpush1.bf16.msra.mxu0 0
    %907 = vmatprep.subr.bf16.mxu0 0
    %908 = vmatpush1.bf16.msra.mxu0 0
    %909 = vmatprep.mubr.bf16.mxu0 0
    %910 = vmatmul.mubr.bf16.gmra.mrb[0].mxu0 %v713
    %v911 = vpop.f32.mrb[0].mxu0
    %v912 = vadd.f32 %v859, %v911
    %v913 = vpop.f32.mrb[0].mxu0
    %v914 = vadd.f32 %v861, %v913
    %v915 = vpop.f32.mrb[0].mxu0
    %v916 = vadd.f32 %v863, %v915
    %v917 = vpop.f32.mrb[0].mxu0
    %v918 = vadd.f32 %v865, %v917
    %919 = vmatprep.mubr.bf16.mxu0 0
    %920 = vmatmul.mubr.bf16.gmra.mrb[0].mxu0 %v716
    %v921 = vpop.f32.mrb[0].mxu0
    %v922 = vadd.f32 %v869, %v921
    %v923 = vpop.f32.mrb[0].mxu0
    %v924 = vadd.f32 %v871, %v923
    %v925 = vpop.f32.mrb[0].mxu0
    %v926 = vadd.f32 %v873, %v925
    %v927 = vpop.f32.mrb[0].mxu0
    %v928 = vadd.f32 %v875, %v927
    %929 = vdwg.mxu0
    %vm930 = vcmp.gt.f32.partialorder %v912, 0.0
    %vm931 = vcmp.gt.f32.partialorder %v914, 0.0
    %vm932 = vcmp.gt.f32.partialorder %v916, 0.0
    %vm933 = vcmp.gt.f32.partialorder %v918, 0.0
    %vm934 = vcmp.gt.f32.partialorder %v922, 0.0
    %vm935 = vcmp.gt.f32.partialorder %v924, 0.0
    %vm936 = vcmp.gt.f32.partialorder %v926, 0.0
    %vm937 = vcmp.gt.f32.partialorder %v928, 0.0
    %v938 = vmul.f32 %v912, 0.2
    %v939 = vmul.f32 %v914, 0.2
    %v940 = vmul.f32 %v916, 0.2
    %v941 = vmul.f32 %v918, 0.2
    %v942 = vmul.f32 %v922, 0.2
    %v943 = vmul.f32 %v924, 0.2
    %v944 = vmul.f32 %v926, 0.2
    %v945 = vmul.f32 %v928, 0.2
    %v946 = vsel %vm930, %v912, %v938
    %v947 = vsel %vm931, %v914, %v939
    %v948 = vsel %vm932, %v916, %v940
    %v949 = vsel %vm933, %v918, %v941
    %v950 = vsel %vm934, %v922, %v942
    %v951 = vsel %vm935, %v924, %v943
    %v952 = vsel %vm936, %v926, %v944
    %v953 = vsel %vm937, %v928, %v945
    %v954 = vpack.c.bf16 %v948, %v946
    %v955 = vpack.c.bf16 %v949, %v947
    %v956 = vpack.c.bf16 %v952, %v950
    %v957 = vpack.c.bf16 %v953, %v951
    %v958 = vld [vmem:[#allocation7] sm:$0xff]
    %v959 = vld [vmem:[#allocation7 + $0x8] sm:$0xff]
    %v960 = vld [vmem:[#allocation7 + $0x10] sm:$0xff]
    %v961 = vld [vmem:[#allocation7 + $0x18] sm:$0xff]
    %v962 = vld [vmem:[#allocation7 + $0x20] sm:$0xff]
    %v963 = vld [vmem:[#allocation7 + $0x28] sm:$0xff]
    %v964 = vld [vmem:[#allocation7 + $0x30] sm:$0xff]
    %v965 = vld [vmem:[#allocation7 + $0x38] sm:$0xff]
    %v966 = vld [vmem:[#allocation7 + $0x40] sm:$0xff]
    %v967 = vld [vmem:[#allocation7 + $0x48] sm:$0xff]
    %v968 = vld [vmem:[#allocation7 + $0x50] sm:$0xff]
    %v969 = vld [vmem:[#allocation7 + $0x58] sm:$0xff]
    %v970 = vld [vmem:[#allocation7 + $0x60] sm:$0xff]
    %v971 = vld [vmem:[#allocation7 + $0x68] sm:$0xff]
    %v972 = vld [vmem:[#allocation7 + $0x70] sm:$0xff]
    %v973 = vld [vmem:[#allocation7 + $0x78] sm:$0xff]
    %v974 = vld [vmem:[#allocation7 + $0x80] sm:$0xff]
    %v975 = vld [vmem:[#allocation7 + $0x88] sm:$0xff]
    %v976 = vld [vmem:[#allocation7 + $0x90] sm:$0xff]
    %v977 = vld [vmem:[#allocation7 + $0x98] sm:$0xff]
    %v978 = vld [vmem:[#allocation7 + $0xa0] sm:$0xff]
    %v979 = vld [vmem:[#allocation7 + $0xa8] sm:$0xff]
    %v980 = vld [vmem:[#allocation7 + $0xb0] sm:$0xff]
    %v981 = vld [vmem:[#allocation7 + $0xb8] sm:$0xff]
    %v982 = vld [vmem:[#allocation7 + $0xc0] sm:$0xff]
    %v983 = vld [vmem:[#allocation7 + $0xc8] sm:$0xff]
    %v984 = vld [vmem:[#allocation7 + $0xd0] sm:$0xff]
    %v985 = vld [vmem:[#allocation7 + $0xd8] sm:$0xff]
    %v986 = vld [vmem:[#allocation7 + $0xe0] sm:$0xff]
    %v987 = vld [vmem:[#allocation7 + $0xe8] sm:$0xff]
    %v988 = vld [vmem:[#allocation7 + $0xf0] sm:$0xff]
    %v989 = vld [vmem:[#allocation7 + $0xf8] sm:$0xff]
    %v990 = vld [vmem:[%s4] sm:$0x3]
    %v992 = vlaneseq
    %v993 = vshrl.u32 %v992, 7
    %v994 = vsub.s32 0, %v993
    %v995 = vrot.slane %v990, %v994
    %v996 = vlaneseq
    %v997 = vshrl.u32 %v996, 7
    %v998 = vsub.s32 1, %v997
    %v999 = vrot.slane %v990, %v998
    %v1034 = vunpack.c.l.b16 %v958
    %v1035 = vunpack.c.h.b16 %v958
    %v1036 = vunpack.c.l.b16 %v959
    %v1037 = vunpack.c.h.b16 %v959
    %v1038 = vunpack.c.l.b16 %v960
    %v1039 = vunpack.c.h.b16 %v960
    %v1040 = vunpack.c.l.b16 %v961
    %v1041 = vunpack.c.h.b16 %v961
    %v1042 = vunpack.c.l.b16 %v962
    %v1043 = vunpack.c.h.b16 %v962
    %v1044 = vunpack.c.l.b16 %v963
    %v1045 = vunpack.c.h.b16 %v963
    %v1046 = vunpack.c.l.b16 %v964
    %v1047 = vunpack.c.h.b16 %v964
    %v1048 = vunpack.c.l.b16 %v965
    %v1049 = vunpack.c.h.b16 %v965
    %v1050 = vunpack.c.l.b16 %v966
    %v1051 = vunpack.c.h.b16 %v966
    %v1052 = vunpack.c.l.b16 %v967
    %v1053 = vunpack.c.h.b16 %v967
    %v1054 = vunpack.c.l.b16 %v968
    %v1055 = vunpack.c.h.b16 %v968
    %v1056 = vunpack.c.l.b16 %v969
    %v1057 = vunpack.c.h.b16 %v969
    %v1058 = vunpack.c.l.b16 %v970
    %v1059 = vunpack.c.h.b16 %v970
    %v1060 = vunpack.c.l.b16 %v971
    %v1061 = vunpack.c.h.b16 %v971
    %v1062 = vunpack.c.l.b16 %v972
    %v1063 = vunpack.c.h.b16 %v972
    %v1064 = vunpack.c.l.b16 %v973
    %v1065 = vunpack.c.h.b16 %v973
    %v1066 = vunpack.c.l.b16 %v974
    %v1067 = vunpack.c.h.b16 %v974
    %v1068 = vunpack.c.l.b16 %v975
    %v1069 = vunpack.c.h.b16 %v975
    %v1070 = vunpack.c.l.b16 %v976
    %v1071 = vunpack.c.h.b16 %v976
    %v1072 = vunpack.c.l.b16 %v977
    %v1073 = vunpack.c.h.b16 %v977
    %v1074 = vunpack.c.l.b16 %v978
    %v1075 = vunpack.c.h.b16 %v978
    %v1076 = vunpack.c.l.b16 %v979
    %v1077 = vunpack.c.h.b16 %v979
    %v1078 = vunpack.c.l.b16 %v980
    %v1079 = vunpack.c.h.b16 %v980
    %v1080 = vunpack.c.l.b16 %v981
    %v1081 = vunpack.c.h.b16 %v981
    %v1082 = vunpack.c.l.b16 %v982
    %v1083 = vunpack.c.h.b16 %v982
    %v1084 = vunpack.c.l.b16 %v983
    %v1085 = vunpack.c.h.b16 %v983
    %v1086 = vunpack.c.l.b16 %v984
    %v1087 = vunpack.c.h.b16 %v984
    %v1088 = vunpack.c.l.b16 %v985
    %v1089 = vunpack.c.h.b16 %v985
    %v1090 = vunpack.c.l.b16 %v986
    %v1091 = vunpack.c.h.b16 %v986
    %v1092 = vunpack.c.l.b16 %v987
    %v1093 = vunpack.c.h.b16 %v987
    %v1094 = vunpack.c.l.b16 %v988
    %v1095 = vunpack.c.h.b16 %v988
    %v1096 = vunpack.c.l.b16 %v989
    %v1097 = vunpack.c.h.b16 %v989
    %v1098 = vpack.c.b16 %v1036, %v1034
    %v1099 = vpack.c.b16 %v1037, %v1035
    %v1100 = vpack.c.b16 %v1040, %v1038
    %v1101 = vpack.c.b16 %v1041, %v1039
    %v1102 = vpack.c.b16 %v1044, %v1042
    %v1103 = vpack.c.b16 %v1045, %v1043
    %v1104 = vpack.c.b16 %v1048, %v1046
    %v1105 = vpack.c.b16 %v1049, %v1047
    %v1106 = vpack.c.b16 %v1052, %v1050
    %v1107 = vpack.c.b16 %v1053, %v1051
    %v1108 = vpack.c.b16 %v1056, %v1054
    %v1109 = vpack.c.b16 %v1057, %v1055
    %v1110 = vpack.c.b16 %v1060, %v1058
    %v1111 = vpack.c.b16 %v1061, %v1059
    %v1112 = vpack.c.b16 %v1064, %v1062
    %v1113 = vpack.c.b16 %v1065, %v1063
    %v1114 = vpack.c.b16 %v1068, %v1066
    %v1115 = vpack.c.b16 %v1069, %v1067
    %v1116 = vpack.c.b16 %v1072, %v1070
    %v1117 = vpack.c.b16 %v1073, %v1071
    %v1118 = vpack.c.b16 %v1076, %v1074
    %v1119 = vpack.c.b16 %v1077, %v1075
    %v1120 = vpack.c.b16 %v1080, %v1078
    %v1121 = vpack.c.b16 %v1081, %v1079
    %v1122 = vpack.c.b16 %v1084, %v1082
    %v1123 = vpack.c.b16 %v1085, %v1083
    %v1124 = vpack.c.b16 %v1088, %v1086
    %v1125 = vpack.c.b16 %v1089, %v1087
    %v1126 = vpack.c.b16 %v1092, %v1090
    %v1127 = vpack.c.b16 %v1093, %v1091
    %v1128 = vpack.c.b16 %v1096, %v1094
    %v1129 = vpack.c.b16 %v1097, %v1095
    %1162 = vmatprep.subr.bf16.mxu0 %v1099
    %1163 = vmatpush1.bf16.msra.mxu0 %v1098
    %1164 = vmatprep.subr.bf16.mxu0 %v1101
    %1165 = vmatpush1.bf16.msra.mxu0 %v1100
    %1166 = vmatprep.subr.bf16.mxu0 %v1103
    %1167 = vmatpush1.bf16.msra.mxu0 %v1102
    %1168 = vmatprep.subr.bf16.mxu0 %v1105
    %1169 = vmatpush1.bf16.msra.mxu0 %v1104
    %1170 = vmatprep.subr.bf16.mxu0 %v1107
    %1171 = vmatpush1.bf16.msra.mxu0 %v1106
    %1172 = vmatprep.subr.bf16.mxu0 %v1109
    %1173 = vmatpush1.bf16.msra.mxu0 %v1108
    %1174 = vmatprep.subr.bf16.mxu0 %v1111
    %1175 = vmatpush1.bf16.msra.mxu0 %v1110
    %1176 = vmatprep.subr.bf16.mxu0 %v1113
    %1177 = vmatpush1.bf16.msra.mxu0 %v1112
    %1178 = vmatprep.subr.bf16.mxu0 %v1115
    %1179 = vmatpush1.bf16.msra.mxu0 %v1114
    %1180 = vmatprep.subr.bf16.mxu0 %v1117
    %1181 = vmatpush1.bf16.msra.mxu0 %v1116
    %1182 = vmatprep.subr.bf16.mxu0 %v1119
    %1183 = vmatpush1.bf16.msra.mxu0 %v1118
    %1184 = vmatprep.subr.bf16.mxu0 %v1121
    %1185 = vmatpush1.bf16.msra.mxu0 %v1120
    %1186 = vmatprep.subr.bf16.mxu0 %v1123
    %1187 = vmatpush1.bf16.msra.mxu0 %v1122
    %1188 = vmatprep.subr.bf16.mxu0 %v1125
    %1189 = vmatpush1.bf16.msra.mxu0 %v1124
    %1190 = vmatprep.subr.bf16.mxu0 %v1127
    %1191 = vmatpush1.bf16.msra.mxu0 %v1126
    %1192 = vmatprep.subr.bf16.mxu0 %v1129
    %1193 = vmatpush1.bf16.msra.mxu0 %v1128
    %1194 = vmatprep.mubr.bf16.mxu0 %v955
    %1195 = vmatmul.mubr.bf16.gmra.mrb[0].mxu0 %v954
    %v1196 = vpop.f32.mrb[0].mxu0
    %v1197 = vadd.f32 %v995, %v1196
    %v1198 = vpop.f32.mrb[0].mxu0
    %v1199 = vadd.f32 %v999, %v1198
    %v1200 = vpop.f32.mrb[0].mxu0
    %v1201 = vadd.f32 %v995, %v1200
    %v1202 = vpop.f32.mrb[0].mxu0
    %v1203 = vadd.f32 %v999, %v1202
    %1204 = vmatprep.mubr.bf16.mxu0 %v957
    %1205 = vmatmul.mubr.bf16.gmra.mrb[0].mxu0 %v956
    %v1206 = vpop.f32.mrb[0].mxu0
    %v1207 = vadd.f32 %v995, %v1206
    %v1208 = vpop.f32.mrb[0].mxu0
    %v1209 = vadd.f32 %v999, %v1208
    %v1210 = vpop.f32.mrb[0].mxu0
    %v1211 = vadd.f32 %v995, %v1210
    %v1212 = vpop.f32.mrb[0].mxu0
    %v1213 = vadd.f32 %v999, %v1212
    %1214 = vdwg.mxu0
    %vm1215 = vcmp.gt.f32.partialorder %v1197, 0.0
    %vm1216 = vcmp.gt.f32.partialorder %v1199, 0.0
    %vm1217 = vcmp.gt.f32.partialorder %v1201, 0.0
    %vm1218 = vcmp.gt.f32.partialorder %v1203, 0.0
    %vm1219 = vcmp.gt.f32.partialorder %v1207, 0.0
    %vm1220 = vcmp.gt.f32.partialorder %v1209, 0.0
    %vm1221 = vcmp.gt.f32.partialorder %v1211, 0.0
    %vm1222 = vcmp.gt.f32.partialorder %v1213, 0.0
    %v1223 = vmul.f32 %v1197, 0.2
    %v1224 = vmul.f32 %v1199, 0.2
    %v1225 = vmul.f32 %v1201, 0.2
    %v1226 = vmul.f32 %v1203, 0.2
    %v1227 = vmul.f32 %v1207, 0.2
    %v1228 = vmul.f32 %v1209, 0.2
    %v1229 = vmul.f32 %v1211, 0.2
    %v1230 = vmul.f32 %v1213, 0.2
    %v1231 = vsel %vm1215, %v1197, %v1223
    %v1232 = vsel %vm1216, %v1199, %v1224
    %v1233 = vsel %vm1217, %v1201, %v1225
    %v1234 = vsel %vm1218, %v1203, %v1226
    %v1235 = vsel %vm1219, %v1207, %v1227
    %v1236 = vsel %vm1220, %v1209, %v1228
    %v1237 = vsel %vm1221, %v1211, %v1229
    %v1238 = vsel %vm1222, %v1213, %v1230
    %v1239 = vld [vmem:[%s5] sm:$0x3]
    %v1241 = vlaneseq
    %v1242 = vshrl.u32 %v1241, 7
    %v1243 = vsub.s32 0, %v1242
    %v1244 = vrot.slane %v1239, %v1243
    %v1245 = vlaneseq
    %v1246 = vshrl.u32 %v1245, 7
    %v1247 = vsub.s32 1, %v1246
    %v1248 = vrot.slane %v1239, %v1247
    %v1251 = vmul.f32 %v1231, %v1244
    %v1252 = vmul.f32 %v1232, %v1248
    %v1253 = vmul.f32 %v1233, %v1244
    %v1254 = vmul.f32 %v1234, %v1248
    %v1255 = vmul.f32 %v1235, %v1244
    %v1256 = vmul.f32 %v1236, %v1248
    %v1257 = vmul.f32 %v1237, %v1244
    %v1258 = vmul.f32 %v1238, %v1248
    %v1259 = vadd.f32 %v1251, %v1252
    %1260 = vadd.xlane.f32.xlu0 %v1259
    %v1261 = vpop.xlane.xlu0 %1260
    %v1262 = vadd.f32 %v1253, %v1254
    %1263 = vadd.xlane.f32.xlu0 %v1262
    %v1264 = vpop.xlane.xlu0 %1263
    %v1265 = vadd.f32 %v1255, %v1256
    %1266 = vadd.xlane.f32.xlu0 %v1265
    %v1267 = vpop.xlane.xlu0 %1266
    %v1268 = vadd.f32 %v1257, %v1258
    %1269 = vadd.xlane.f32.xlu0 %v1268
    %v1270 = vpop.xlane.xlu0 %1269
    %s1271 = sld [smem:[#allocation2]]
    %v1272 = vstv %s1271
    %v1273 = vadd.f32 %v1261, %v1272
    %v1274 = vadd.f32 %v1264, %v1272
    %v1275 = vadd.f32 %v1267, %v1272
    %v1276 = vadd.f32 %v1270, %v1272
    %v1277 = vxor.u32 %v1273, 2147483648
    %v1278 = vxor.u32 %v1274, 2147483648
    %v1279 = vxor.u32 %v1275, 2147483648
    %v1280 = vxor.u32 %v1276, 2147483648
    %v1281 = vmul.f32 %v1277, 1.442695
    %v1282 = vpow.pop %v1281
    %v1283 = vmul.f32 %v1278, 1.442695
    %v1284 = vpow.pop %v1283
    %v1285 = vmul.f32 %v1279, 1.442695
    %v1286 = vpow.pop %v1285
    %v1287 = vmul.f32 %v1280, 1.442695
    %v1288 = vpow.pop %v1287
    %v1289 = vadd.f32 %v1282, 1.0
    %v1290 = vadd.f32 %v1284, 1.0
    %v1291 = vadd.f32 %v1286, 1.0
    %v1292 = vadd.f32 %v1288, 1.0
    %v1293 = vrcp.pop %v1289
    %v1294 = vmul.f32 1.0, %v1293
    %v1295 = vrcp.pop %v1290
    %v1296 = vmul.f32 1.0, %v1295
    %v1297 = vrcp.pop %v1291
    %v1298 = vmul.f32 1.0, %v1297
    %v1299 = vrcp.pop %v1292
    %v1300 = vmul.f32 1.0, %v1299
    %vm1301 = vcmask 7168
    %1302 = vst.msk [vmem:[%s7] sm:$0xff] %vm1301, %v1294
    %1303 = vst.msk [vmem:[%s7 + $0x8] sm:$0xff] %vm1301, %v1296
    %1304 = vst.msk [vmem:[%s7 + $0x10] sm:$0xff] %vm1301, %v1298
    %1305 = vst.msk [vmem:[%s7 + $0x18] sm:$0xff] %vm1301, %v1300
    // Predicated region
    $region42: #{tpu_custom_call.1} parent=1 // pred_check
      _
    $region43: #{tpu_custom_call.1} parent=1 // pred_check_branch
      %1307 = sbr.rel (0) target = $region45
    $region44: #{tpu_custom_call.1} parent=1 // pred_region
      _
    $region45: #{tpu_custom_call.1} parent=1 // pred_fallthru
      _
    // Predicated region
    $region46: #{tpu_custom_call.1} parent=1 // pred_check
      _
    $region47: #{tpu_custom_call.1} parent=1 // pred_check_branch
      %1309 = sbr.rel (0) target = $region49
    $region48: #{tpu_custom_call.1} parent=1 // pred_region
      _
    $region49: #{tpu_custom_call.1} parent=1 // pred_fallthru
      _
    %1310 = vsyncpa [#allocation4], 1
    %1311 = vsyncpa [#allocation6], 1

</llo_original>
